<compile_context>
chip_gen: v5e
topology: v5e:2x2
jax: 0.10.0
libtpu: 0.0.40
codegen_flags: <defaults>
</compile_context>

<pallas_src>
import functools

import jax
import jax.numpy as jnp
import numpy as np
from jax import lax
from jax.experimental import pallas as pl
from jax.experimental.pallas import tpu as pltpu


def _round_up(x, m):
    return ((x + m - 1) // m) * m


def _conv_bn_relu_kernel(x_ref, w_ref, scale_ref, bias_ref, o_ref, *,
                         tap_starts, l_tile):
    """One (batch, group, L-tile) output block per grid step.

    x_ref:     (1, 1, 1, rows, C_red)       windowed input tile
    w_ref:     (1, n_taps, C_red, C_out_pad) per-group weight (resident block)
    scale_ref: (1, 1, C_out_pad) f32        folded BN scale
    bias_ref:  (1, 1, C_out_pad) f32        folded conv-bias + BN shift
    o_ref:     (1, 1, l_tile, C_out_pad)    lane-dense output block
    """
    acc = None
    for i, start in enumerate(tap_starts):   # static unrolled tap loop
        # contiguous, statically-offset read (no strided ds)
        xk = x_ref[0, 0, 0, pl.ds(start, l_tile), :]
        part = jnp.dot(xk, w_ref[0, i], preferred_element_type=jnp.float32)
        acc = part if acc is None else acc + part   # value accumulation

    # Folded BatchNorm (eval) + ReLU in f32 on the VPU; single lane-dense store.
    y = acc * scale_ref[0] + bias_ref[0]
    o_ref[0, 0] = jnp.maximum(y, 0.0).astype(o_ref.dtype)


def conv_bn_relu(x_ncl, weight, conv_bias, bn_gamma, bn_beta, bn_mean, bn_var,
                 *, stride, groups, eps=1e-5, mxu_dtype=jnp.bfloat16,
                 l_tile=None, out_layout="NCL"):
    """Forward pass equivalent to the PyTorch ConvBnRelu module (eval mode).

    x_ncl:   (N, C_in, L)                  -- PyTorch NCL layout
    weight:  (C_out, C_in/groups, K)
    returns: (N, C_out, L_out) for out_layout="NCL", (N, L_out, C_out) for "NLC".
    """
    assert out_layout in ("NCL", "NLC")
    n, c_in, length = x_ncl.shape
    c_out, cin_g, k = weight.shape
    assert c_in % groups == 0 and c_out % groups == 0
    assert cin_g == c_in // groups
    cout_g = c_out // groups
    padding = (k - 1) // 2
    l_pad_len = length + 2 * padding
    l_out = (l_pad_len - k) // stride + 1

    # ---- group decomposition: per-group grid vs dense block-diagonal --------
    def _padded_macs(ci, co, g):
        if k * ci <= 128:                      # im2col-packed: one matmul
            return g * _round_up(k * ci, 128) * _round_up(co, 128)
        return g * k * _round_up(ci, 128) * _round_up(co, 128)

    if groups > 1 and _padded_macs(cin_g, cout_g, groups) <= _padded_macs(c_in, c_out, 1):
        G = groups                             # per-group grid axis
    else:
        G = 1                                  # dense (block-diagonal if grouped)
    CI = c_in // G
    CO = c_out // G
    use_im2col = (k * CI) <= 128               # pack taps into the contraction
    n_taps = 1 if use_im2col else k
    cont = _round_up(k * CI, 128) if use_im2col else _round_up(CI, 128)
    cout_pad = _round_up(CO, 128)

    # ---- tile / VMEM sizing from actual per-step footprint ------------------
    w_bytes = jnp.dtype(mxu_dtype).itemsize
    out_bytes = jnp.dtype(x_ncl.dtype).itemsize

    def _rows(lt):
        if use_im2col:
            return lt
        if stride == 1:
            return _round_up(lt + k - 1, 8)    # halo'd window
        return k * lt                          # per-tap de-interleaved window

    def _footprint(lt):
        return (2 * _rows(lt) * cont * w_bytes            # double-buffered input
                + 2 * n_taps * cont * cout_pad * w_bytes  # weight (double-buffered)
                + 2 * lt * cout_pad * out_bytes           # output blocks
                + 4 * cout_pad * 4)                       # scale/bias

    try:
        vmem_cap = int(pltpu.get_tpu_info().vmem_capacity_bytes)
    except Exception:
        vmem_cap = 64 << 20                    # conservative (v7x-sized) fallback
    budget = vmem_cap * 3 // 4                 # ~96 MiB v5e/v6e, ~48 MiB v7x

    if l_tile is None:
        l_tile = min(1024, _round_up(l_out, 8))
        # v7x has 2 TensorCores: ensure >= 2 parallel grid steps when possible.
        if n * G * pl.cdiv(l_out, l_tile) < 2 and l_out > 8:
            l_tile = _round_up(pl.cdiv(l_out, 2), 8)
        while l_tile > 8 and _footprint(l_tile) > budget:
            l_tile = max(8, _round_up(l_tile // 2, 8))
    l_tile = max(8, _round_up(l_tile, 8))
    t_tiles = pl.cdiv(l_out, l_tile)
    rows = _rows(l_tile)

    fp = _footprint(l_tile)
    vmem_limit = min(max(int(fp * 1.25), 32 << 20), budget)
    vmem_limit = max(vmem_limit, fp + (2 << 20))   # never below true footprint
    vmem_limit = int(min(vmem_limit, vmem_cap))

    # ---- layout glue (plain JAX): group split, pad, window ------------------
    x_nlc = jnp.transpose(x_ncl, (0, 2, 1))                              # (N,L,Cin)
    x_g = jnp.transpose(x_nlc.reshape(n, length, G, CI), (0, 2, 1, 3))   # (N,G,L,CI)
    x_g = jnp.pad(x_g, ((0, 0), (0, 0), (padding, padding), (0, 0)))     # (N,G,Lp,CI)

    if use_im2col:
        # pack the K taps into the contraction: column = kk*CI + c
        pos = (jnp.arange(t_tiles)[:, None, None] * (l_tile * stride)
               + jnp.arange(l_tile)[None, :, None] * stride
               + jnp.arange(k)[None, None, :])                           # (T,lt,k)
        pos = jnp.minimum(pos, l_pad_len - 1)
        x_win = x_g[:, :, pos, :]                                        # (N,G,T,lt,k,CI)
        x_win = x_win.reshape(n, G, t_tiles, l_tile, k * CI)
        x_win = jnp.pad(x_win, ((0, 0),) * 4 + ((0, cont - k * CI),))
        tap_starts = (0,)
    else:
        x_g = jnp.pad(x_g, ((0, 0), (0, 0), (0, 0), (0, cont - CI)))
        if stride == 1:
            # halo'd window: only k-1 duplicated rows per tile
            pos = (jnp.arange(t_tiles)[:, None] * l_tile
                   + jnp.arange(rows)[None, :])                          # (T,rows)
            pos = jnp.minimum(pos, l_pad_len - 1)
            x_win = x_g[:, :, pos, :]                                    # (N,G,T,rows,cont)
            tap_starts = tuple(range(k))
        else:
            # stride > 1: de-interleave per tap so in-kernel reads are contiguous
            pos = (jnp.arange(t_tiles)[:, None, None] * (l_tile * stride)
                   + jnp.arange(k)[None, :, None]
                   + jnp.arange(l_tile)[None, None, :] * stride)         # (T,k,lt)
            pos = jnp.minimum(pos, l_pad_len - 1)
            x_win = x_g[:, :, pos, :].reshape(n, G, t_tiles, rows, cont)
            tap_starts = tuple(kk * l_tile for kk in range(k))
    x_win = x_win.astype(mxu_dtype)

    # ---- weight: (G, n_taps, cont, cout_pad) --------------------------------
    if G == groups:
        # (C_out, Cin/g, K) -> (G, K, CI, CO)
        w_g = jnp.transpose(weight.reshape(groups, cout_g, cin_g, k), (0, 3, 2, 1))
    else:
        # groups > 1 lowered to a dense block-diagonal weight (G == 1)
        w_t = jnp.transpose(weight, (2, 1, 0))                           # (K,cin_g,Cout)
        w_d = jnp.zeros((k, c_in, c_out), weight.dtype)
        for g in range(groups):                                          # static loop
            w_d = w_d.at[:, g * cin_g:(g + 1) * cin_g,
                         g * cout_g:(g + 1) * cout_g].set(
                w_t[:, :, g * cout_g:(g + 1) * cout_g])
        w_g = w_d[None]                                                  # (1,K,Cin,Cout)

    if use_im2col:
        w_pack = w_g.reshape(G, 1, k * CI, CO)                           # row = kk*CI+c
        w_pack = jnp.pad(w_pack, ((0, 0), (0, 0),
                                  (0, cont - k * CI), (0, cout_pad - CO)))
    else:
        w_pack = jnp.pad(w_g, ((0, 0), (0, 0),
                               (0, cont - CI), (0, cout_pad - CO)))
    w_pack = w_pack.astype(mxu_dtype)

    # ---- folded BatchNorm (eval): y = conv(x)*scale + shift -----------------
    if conv_bias is None:                                                # bias=False
        conv_bias = jnp.zeros((c_out,), jnp.float32)
    scale = (bn_gamma / jnp.sqrt(bn_var + eps)).astype(jnp.float32)
    shift = ((conv_bias - bn_mean) * scale + bn_beta).astype(jnp.float32)
    scale_g = jnp.pad(scale.reshape(G, CO), ((0, 0), (0, cout_pad - CO)))[:, None, :]
    shift_g = jnp.pad(shift.reshape(G, CO), ((0, 0), (0, cout_pad - CO)))[:, None, :]

    kernel = functools.partial(_conv_bn_relu_kernel,
                               tap_starts=tap_starts, l_tile=l_tile)

    out_padded = pl.pallas_call(
        kernel,
        out_shape=jax.ShapeDtypeStruct((n, G, t_tiles * l_tile, cout_pad),
                                       x_ncl.dtype),
        grid_spec=pltpu.PrefetchScalarGridSpec(
            num_scalar_prefetch=0,
            grid=(n, G, t_tiles),
            in_specs=[
                pl.BlockSpec((1, 1, 1, rows, cont),
                             lambda b, g, t: (b, g, t, 0, 0)),
                pl.BlockSpec((1, n_taps, cont, cout_pad),
                             lambda b, g, t: (g, 0, 0, 0)),
                pl.BlockSpec((1, 1, cout_pad), lambda b, g, t: (g, 0, 0)),
                pl.BlockSpec((1, 1, cout_pad), lambda b, g, t: (g, 0, 0)),
            ],
            out_specs=pl.BlockSpec((1, 1, l_tile, cout_pad),
                                   lambda b, g, t: (b, g, t, 0)),
        ),
        compiler_params=pltpu.CompilerParams(
            dimension_semantics=("parallel", "parallel", "parallel"),
            vmem_limit_bytes=vmem_limit),
    )(x_win, w_pack, scale_g, shift_g)

    # ---- strip padding, reassemble groups/channels ---------------------------
    y = out_padded[:, :, :l_out, :CO]                       # (N,G,L_out,CO)
    y = jnp.transpose(y, (0, 2, 1, 3)).reshape(n, l_out, c_out)   # (N,L_out,C_out)
    if out_layout == "NLC":
        return y
    return jnp.transpose(y, (0, 2, 1))                      # (N,C_out,L_out)


def _reference(x_ncl, weight, conv_bias, bn_gamma, bn_beta, bn_mean, bn_var,
               *, stride, groups, eps=1e-5):
    """Pure-JAX reference (lax conv) for correctness checking."""
    k = weight.shape[-1]
    padding = (k - 1) // 2
    y = lax.conv_general_dilated(
        x_ncl, weight,
        window_strides=(stride,),
        padding=[(padding, padding)],
        dimension_numbers=("NCH", "OIH", "NCH"),
        feature_group_count=groups)
    if conv_bias is not None:
        y = y + conv_bias[None, :, None]
    scale = bn_gamma / jnp.sqrt(bn_var + eps)
    y = (y - bn_mean[None, :, None]) * scale[None, :, None] + bn_beta[None, :, None]
    return jnp.maximum(y, 0.0)


if __name__ == "__main__":
    key = jax.random.PRNGKey(0)

    def make_params(pkey, c_in, c_out, groups, ksize):
        k_w, k_b, k_g, k_beta, k_m, k_v = jax.random.split(pkey, 6)
        weight = 0.1 * jax.random.normal(
            k_w, (c_out, c_in // groups, ksize), dtype=jnp.float32)
        conv_bias = 0.1 * jax.random.normal(k_b, (c_out,), dtype=jnp.float32)
        bn_gamma = 1.0 + 0.1 * jax.random.normal(k_g, (c_out,), dtype=jnp.float32)
        bn_beta = 0.1 * jax.random.normal(k_beta, (c_out,), dtype=jnp.float32)
        bn_mean = 0.1 * jax.random.normal(k_m, (c_out,), dtype=jnp.float32)
        bn_var = jnp.abs(jax.random.normal(k_v, (c_out,), dtype=jnp.float32)) + 0.5
        return weight, conv_bias, bn_gamma, bn_beta, bn_mean, bn_var

    def run_case(case_key, n, c_in, c_out, length, ksize, stride, groups,
                 mxu_dtype, rtol, atol):
        k_x, k_p = jax.random.split(case_key)
        x = jax.random.normal(k_x, (n, c_in, length), dtype=jnp.float32)
        params = make_params(k_p, c_in, c_out, groups, ksize)
        out = jax.block_until_ready(conv_bn_relu(
            x, *params, stride=stride, groups=groups, mxu_dtype=mxu_dtype))
        ref = _reference(x, *params, stride=stride, groups=groups)
        np.testing.assert_allclose(np.asarray(out), np.asarray(ref),
                                   rtol=rtol, atol=atol)

    keys = jax.random.split(key, 5)
    # 1) tiny channels, groups=1, stride=1 -> im2col path, exact f32 operands
    run_case(keys[0], 2, 4, 8, 16, 3, 1, 1, jnp.float32, 1e-5, 1e-5)
    # 2) same config, bf16 MXU operands (default fast path on v5e/v6e/v7x)
    run_case(keys[1], 2, 4, 8, 16, 3, 1, 1, jnp.bfloat16, 5e-2, 1e-1)
    # 3) grouped + strided conv, tiny per-group channels -> dense block-diag im2col
    run_case(keys[2], 2, 4, 8, 16, 3, 2, 2, jnp.float32, 1e-5, 1e-5)
    # 4) wide C_in, stride=1 -> halo'd K-tap matmul path
    run_case(keys[3], 2, 192, 8, 32, 3, 1, 1, jnp.float32, 1e-4, 1e-4)
    # 5) grouped, wide per-group channels, stride=2 -> per-group grid + de-interleaved taps
    run_case(keys[4], 2, 256, 256, 32, 5, 2, 2, jnp.float32, 1e-4, 1e-4)

    print("KERNEL_OK")
</pallas_src>

<mosaic_0001>
module attributes {stable_mosaic.version = 11 : i64} {
  func.func @_conv_bn_relu_kernel(%arg0: i32, %arg1: i32, %arg2: i32, %arg3: memref<1x1x1x16x128xf32, #tpu.memory_space<vmem>>, %arg4: memref<1x1x128x128xf32, #tpu.memory_space<vmem>>, %arg5: memref<1x1x128xf32, #tpu.memory_space<vmem>>, %arg6: memref<1x1x128xf32, #tpu.memory_space<vmem>>, %arg7: memref<1x1x16x128xf32, #tpu.memory_space<vmem>>) attributes {dimension_semantics = [#tpu.dimension_semantics<parallel>, #tpu.dimension_semantics<parallel>, #tpu.dimension_semantics<parallel>], iteration_bounds = array<i64: 2, 1, 1>, scalar_prefetch = 0 : i64, scratch_operands = 0 : i64, tpu.core_type = #tpu.core_type<tc>, window_params = [{transform_indices = @transform_0, window_bounds = array<i64: 1, 1, 1, 16, 128>}, {transform_indices = @transform_1, window_bounds = array<i64: 1, 1, 128, 128>}, {transform_indices = @transform_2, window_bounds = array<i64: 1, 1, 128>}, {transform_indices = @transform_3, window_bounds = array<i64: 1, 1, 128>}, {transform_indices = @transform_4, window_bounds = array<i64: 1, 1, 16, 128>}]} {
    %c0 = arith.constant 0 : index
    %c0_0 = arith.constant 0 : index
    %c0_1 = arith.constant 0 : index
    %c0_2 = arith.constant 0 : index
    %c0_3 = arith.constant 0 : index
    %0 = vector.load %arg3[%c0, %c0_0, %c0_1, %c0_2, %c0_3] : memref<1x1x1x16x128xf32, #tpu.memory_space<vmem>>, vector<1x1x1x16x128xf32>
    %1 = vector.shape_cast %0 : vector<1x1x1x16x128xf32> to vector<16x128xf32>
    %c0_4 = arith.constant 0 : index
    %c0_5 = arith.constant 0 : index
    %c0_6 = arith.constant 0 : index
    %c0_7 = arith.constant 0 : index
    %2 = vector.load %arg4[%c0_4, %c0_5, %c0_6, %c0_7] : memref<1x1x128x128xf32, #tpu.memory_space<vmem>>, vector<1x1x128x128xf32>
    %3 = vector.shape_cast %2 : vector<1x1x128x128xf32> to vector<128x128xf32>
    %cst = arith.constant dense<0.000000e+00> : vector<16x128xf32>
    %4 = tpu.matmul %1, %3, %cst {dimension_numbers = #tpu.dot_dimension_numbers<[1], [0], [0], [1], [0, 0, 1, 1], [], []>} : vector<16x128xf32>, vector<128x128xf32>, vector<16x128xf32> -> vector<16x128xf32>
    %c0_8 = arith.constant 0 : index
    %c0_9 = arith.constant 0 : index
    %c0_10 = arith.constant 0 : index
    %5 = vector.load %arg5[%c0_8, %c0_9, %c0_10] : memref<1x1x128xf32, #tpu.memory_space<vmem>>, vector<1x1x128xf32>
    %6 = vector.shape_cast %5 : vector<1x1x128xf32> to vector<1x128xf32>
    %7 = vector.broadcast %6 : vector<1x128xf32> to vector<16x128xf32>
    %8 = arith.mulf %4, %7 : vector<16x128xf32>
    %c0_11 = arith.constant 0 : index
    %c0_12 = arith.constant 0 : index
    %c0_13 = arith.constant 0 : index
    %9 = vector.load %arg6[%c0_11, %c0_12, %c0_13] : memref<1x1x128xf32, #tpu.memory_space<vmem>>, vector<1x1x128xf32>
    %10 = vector.shape_cast %9 : vector<1x1x128xf32> to vector<1x128xf32>
    %11 = vector.broadcast %10 : vector<1x128xf32> to vector<16x128xf32>
    %12 = arith.addf %8, %11 : vector<16x128xf32>
    %cst_14 = arith.constant 0.000000e+00 : f32
    %13 = vector.broadcast %cst_14 : f32 to vector<16x128xf32>
    %14 = arith.maximumf %12, %13 : vector<16x128xf32>
    %c0_15 = arith.constant 0 : index
    %c0_16 = arith.constant 0 : index
    %c0_17 = arith.constant 0 : index
    %c0_18 = arith.constant 0 : index
    %15 = vector.load %arg7[%c0_15, %c0_16, %c0_17, %c0_18] : memref<1x1x16x128xf32, #tpu.memory_space<vmem>>, vector<1x1x16x128xf32>
    %16 = vector.shape_cast %15 : vector<1x1x16x128xf32> to vector<16x128xf32>
    %17 = vector.shape_cast %14 : vector<16x128xf32> to vector<1x1x16x128xf32>
    tpu.vector_store %arg7[%c0_15, %c0_16, %c0_17, %c0_18], %17 {strides = array<i32>} : memref<1x1x16x128xf32, #tpu.memory_space<vmem>>, vector<1x1x16x128xf32>,
    return
  }
  func.func @transform_0(%arg0: i32, %arg1: i32, %arg2: i32) -> (i32, i32, i32, i32, i32) {
    %c0_i32 = arith.constant 0 : i32
    %c0_i32_0 = arith.constant 0 : i32
    %c0_i32_1 = arith.constant 0 : i32
    return %arg0, %arg1, %arg2, %c0_i32, %c0_i32_0 : i32, i32, i32, i32, i32
  }
  func.func @transform_1(%arg0: i32, %arg1: i32, %arg2: i32) -> (i32, i32, i32, i32) {
    %c0_i32 = arith.constant 0 : i32
    %c0_i32_0 = arith.constant 0 : i32
    %c0_i32_1 = arith.constant 0 : i32
    %c0_i32_2 = arith.constant 0 : i32
    return %arg1, %c0_i32, %c0_i32_0, %c0_i32_1 : i32, i32, i32, i32
  }
  func.func @transform_2(%arg0: i32, %arg1: i32, %arg2: i32) -> (i32, i32, i32) {
    %c0_i32 = arith.constant 0 : i32
    %c0_i32_0 = arith.constant 0 : i32
    %c0_i32_1 = arith.constant 0 : i32
    return %arg1, %c0_i32, %c0_i32_0 : i32, i32, i32
  }
  func.func @transform_3(%arg0: i32, %arg1: i32, %arg2: i32) -> (i32, i32, i32) {
    %c0_i32 = arith.constant 0 : i32
    %c0_i32_0 = arith.constant 0 : i32
    %c0_i32_1 = arith.constant 0 : i32
    return %arg1, %c0_i32, %c0_i32_0 : i32, i32, i32
  }
  func.func @transform_4(%arg0: i32, %arg1: i32, %arg2: i32) -> (i32, i32, i32, i32) {
    %c0_i32 = arith.constant 0 : i32
    %c0_i32_0 = arith.constant 0 : i32
    return %arg0, %arg1, %arg2, %c0_i32 : i32, i32, i32, i32
  }
}

</mosaic_0001>

<llo_original>
// kernel: tpu_custom_call.1
$region0: #{tpu_custom_call.1}
  #allocation0 [shape = 'u32[]', space=smem, size = 0x4, offset = 0x4, fixed_abs, tag = 'smem constant byte address 0x4 - core index']
  #allocation1 [shape = 'u32[72,128]{1,0:T(1,128)}', space=vmem, size = 0x9000, scoped, tag = 'internal scratch']
  %s0 = inlined_call_operand.hbm [shape: f32[2,1,1,16,128], index: 0, kind: input, shape index: {}]
  %s1 = inlined_call_operand.hbm [shape: f32[1,1,128,128], index: 1, kind: input, shape index: {}]
  %s2 = inlined_call_operand.vmem [shape: f32[1,1,128], index: 2, kind: input, shape index: {}]
  %s3 = inlined_call_operand.vmem [shape: f32[1,1,128], index: 3, kind: input, shape index: {}]
  %s4 = inlined_call_operand.hbm [shape: f32[2,1,16,128], index: 4, kind: output, shape index: {}]
  %s5 = sld [smem:[#allocation0]]
  $region57: #{tpu_custom_call.1} parent=0
    _
  %s7 = ssub.s32 1, %s5
  %s8 = scalar_select 0, %s7, %s5
  $region1: #{tpu_custom_call.1} parent=0
    #allocation2 [shape = 'u8[16384]{0}', space=vmem, size = 0x4000, scoped, tag = 'input window, operand 0']
    #allocation3 [shape = 's32[2]{0}', space=sflag, size = 0x8, scoped, tag = 'scoped memory for tpu_custom_call.1']
    #allocation4 [shape = 's32[2]{0}', space=sflag, size = 0x8, scoped, tag = 'scoped memory for tpu_custom_call.1']
    #allocation5 [shape = 'u8[65536]{0}', space=vmem, size = 0x10000, scoped, tag = 'input window, operand 1, single buffered']
    #allocation6 [shape = 's32[1]{0}', space=sflag, size = 0x4, scoped, tag = 'scoped memory for tpu_custom_call.1']
    #allocation7 [shape = 'u8[16384]{0}', space=vmem, size = 0x4000, scoped, tag = 'output window, operand 0']
    %9 = vsyncpa [#allocation3], 0
    %s10 = scalar_lea.sflag [#allocation3], 1
    %11 = vsyncpa %s10, 0
    %12 = vsyncpa [#allocation6], 0
    %13 = vsyncpa [#allocation4], 0
    %s14 = scalar_lea.sflag [#allocation4], 1
    %15 = vsyncpa %s14, 0
    loop: start=0, step=1, limit=4
    $region2: #{tpu_custom_call.1} parent=1 // loop_pre_header
      _
    $region3: #{tpu_custom_call.1} parent=1 // loop_header
      %s17 = sphi 0, %s21
      %p18 = scmp.ge.s32.totalorder %s17, 4
      %s24 = sphi 0, %s43
      %s25 = sphi 0, %s39
      %s26 = sphi 0, %s35
      %s27 = sphi 0, %s24
      %s28 = sphi 0, %s25
      %s29 = sphi 0, %s26
      %s30 = sphi 0, %s27
      %s31 = sphi 0, %s28
      %s32 = sphi 0, %s29
      %s50 = sphi 0, %s52
      %s53 = sphi 0, %s50
      %s54 = sphi 0, %s53
      %s70 = sphi 0, %s54
      %s76 = sphi 0, %s78
      %s79 = sphi 0, %s76
      %s80 = sphi 0, %s79
      %s96 = sphi 0, %s80
      %s102 = sphi 0, %s104
      %s105 = sphi 0, %s102
      %s106 = sphi 0, %s105
      %s122 = sphi 0, %s106
      %s128 = sphi 0, %s130
      %s131 = sphi 0, %s128
      %s132 = sphi 0, %s131
      %s148 = sphi 0, %s132
      %s158 = sphi 0, %s160
      %s161 = sphi 0, %s158
      %s162 = sphi 0, %s161
      %s178 = sphi 0, %s162
    $region4: #{tpu_custom_call.1} parent=1 // loop_header_branch
      %20 = sbr.rel (%p18) target = $region8
    $region5: #{tpu_custom_call.1} parent=1 // loop_body
      %s22 = ssub.s32 %s17, 1
      %s23 = ssub.s32 %s17, 2
      %s33 = sadd.s32 1, %s26
      %p34 = scmp.ge.s32.totalorder %s33, 1
      %s35 = scalar_select %p34, 0, %s33
      %s36 = sadd.s32 1, %s25
      %s37 = scalar_select %p34, %s36, %s25
      %p38 = scmp.ge.s32.totalorder %s37, 1
      %s39 = scalar_select %p38, 0, %s37
      %s40 = sadd.s32 1, %s24
      %s41 = scalar_select %p38, %s40, %s24
      %p42 = scmp.ge.s32.totalorder %s41, 2
      %s43 = scalar_select %p42, 0, %s41
      %s44 = ssub.s32 %s24, %s43
      %s45 = ssub.s32 %s25, %s39
      %s46 = sor.u32 %s44, %s45
      %s47 = ssub.s32 %s26, %s35
      %s48 = sor.u32 %s46, %s47
      %p49 = scmp.eq.s32.totalorder %s48, 0
      %s51 = sadd.s32 %s50, 1
      %s52 = scalar_select %p49, %s50, %s51
      %p55 = pneg %p49
      %p56 = scmp.eq.s32.totalorder %s17, 1
      %p57 = por %p55, %p56
      %p58 = scmp.ne.s32.totalorder %s50, %s53
      %p59 = scmp.eq.s32.totalorder %s17, 0
      %p60 = por %p58, %p59
      %p61 = scmp.ne.s32.totalorder %s50, %s53
      %p62 = scmp.eq.s32.totalorder %s22, 1
      %p63 = por %p61, %p62
      %p64 = scmp.ne.s32.totalorder %s53, %s54
      %p65 = scmp.eq.s32.totalorder %s22, 0
      %p66 = por %p64, %p65
      %p67 = scmp.ne.s32.totalorder %s53, %s54
      %p68 = scmp.eq.s32.totalorder %s23, 1
      %p69 = por %p67, %p68
      %p71 = scmp.ne.s32.totalorder %s54, %s70
      %p72 = scmp.eq.s32.totalorder %s23, 0
      %p73 = por %p71, %p72
      %s74 = ssub.s32 %s25, %s39
      %p75 = scmp.eq.s32.totalorder %s74, 0
      %s77 = sadd.s32 %s76, 1
      %s78 = scalar_select %p75, %s76, %s77
      %p81 = pneg %p75
      %p82 = scmp.eq.s32.totalorder %s17, 1
      %p83 = por %p81, %p82
      %p84 = scmp.ne.s32.totalorder %s76, %s79
      %p85 = scmp.eq.s32.totalorder %s17, 0
      %p86 = por %p84, %p85
      %p87 = scmp.ne.s32.totalorder %s76, %s79
      %p88 = scmp.eq.s32.totalorder %s22, 1
      %p89 = por %p87, %p88
      %p90 = scmp.ne.s32.totalorder %s79, %s80
      %p91 = scmp.eq.s32.totalorder %s22, 0
      %p92 = por %p90, %p91
      %p93 = scmp.ne.s32.totalorder %s79, %s80
      %p94 = scmp.eq.s32.totalorder %s23, 1
      %p95 = por %p93, %p94
      %p97 = scmp.ne.s32.totalorder %s80, %s96
      %p98 = scmp.eq.s32.totalorder %s23, 0
      %p99 = por %p97, %p98
      %s100 = ssub.s32 %s25, %s39
      %p101 = scmp.eq.s32.totalorder %s100, 0
      %s103 = sadd.s32 %s102, 1
      %s104 = scalar_select %p101, %s102, %s103
      %p107 = pneg %p101
      %p108 = scmp.eq.s32.totalorder %s17, 1
      %p109 = por %p107, %p108
      %p110 = scmp.ne.s32.totalorder %s102, %s105
      %p111 = scmp.eq.s32.totalorder %s17, 0
      %p112 = por %p110, %p111
      %p113 = scmp.ne.s32.totalorder %s102, %s105
      %p114 = scmp.eq.s32.totalorder %s22, 1
      %p115 = por %p113, %p114
      %p116 = scmp.ne.s32.totalorder %s105, %s106
      %p117 = scmp.eq.s32.totalorder %s22, 0
      %p118 = por %p116, %p117
      %p119 = scmp.ne.s32.totalorder %s105, %s106
      %p120 = scmp.eq.s32.totalorder %s23, 1
      %p121 = por %p119, %p120
      %p123 = scmp.ne.s32.totalorder %s106, %s122
      %p124 = scmp.eq.s32.totalorder %s23, 0
      %p125 = por %p123, %p124
      %s126 = ssub.s32 %s25, %s39
      %p127 = scmp.eq.s32.totalorder %s126, 0
      %s129 = sadd.s32 %s128, 1
      %s130 = scalar_select %p127, %s128, %s129
      %p133 = pneg %p127
      %p134 = scmp.eq.s32.totalorder %s17, 1
      %p135 = por %p133, %p134
      %p136 = scmp.ne.s32.totalorder %s128, %s131
      %p137 = scmp.eq.s32.totalorder %s17, 0
      %p138 = por %p136, %p137
      %p139 = scmp.ne.s32.totalorder %s128, %s131
      %p140 = scmp.eq.s32.totalorder %s22, 1
      %p141 = por %p139, %p140
      %p142 = scmp.ne.s32.totalorder %s131, %s132
      %p143 = scmp.eq.s32.totalorder %s22, 0
      %p144 = por %p142, %p143
      %p145 = scmp.ne.s32.totalorder %s131, %s132
      %p146 = scmp.eq.s32.totalorder %s23, 1
      %p147 = por %p145, %p146
      %p149 = scmp.ne.s32.totalorder %s132, %s148
      %p150 = scmp.eq.s32.totalorder %s23, 0
      %p151 = por %p149, %p150
      %s152 = ssub.s32 %s24, %s43
      %s153 = ssub.s32 %s25, %s39
      %s154 = sor.u32 %s152, %s153
      %s155 = ssub.s32 %s26, %s35
      %s156 = sor.u32 %s154, %s155
      %p157 = scmp.eq.s32.totalorder %s156, 0
      %s159 = sadd.s32 %s158, 1
      %s160 = scalar_select %p157, %s158, %s159
      %p163 = pneg %p157
      %p164 = scmp.eq.s32.totalorder %s17, 1
      %p165 = por %p163, %p164
      %p166 = scmp.ne.s32.totalorder %s158, %s161
      %p167 = scmp.eq.s32.totalorder %s17, 0
      %p168 = por %p166, %p167
      %p169 = scmp.ne.s32.totalorder %s158, %s161
      %p170 = scmp.eq.s32.totalorder %s22, 1
      %p171 = por %p169, %p170
      %p172 = scmp.ne.s32.totalorder %s161, %s162
      %p173 = scmp.eq.s32.totalorder %s22, 0
      %p174 = por %p172, %p173
      %p175 = scmp.ne.s32.totalorder %s161, %s162
      %p176 = scmp.eq.s32.totalorder %s23, 1
      %p177 = por %p175, %p176
      %p179 = scmp.ne.s32.totalorder %s162, %s178
      %p180 = scmp.eq.s32.totalorder %s23, 0
      %p181 = por %p179, %p180
      %p182 = scmp.le.s32.totalorder 1, %s17
      %p183 = scmp.lt.s32.totalorder %s17, 3
      %p184 = pnand %p182, %p183
      %p185 = pneg %p184
      // Predicated region
      $region9: #{tpu_custom_call.1} parent=5 // pred_check
        _
      $region10: #{tpu_custom_call.1} parent=5 // pred_check_branch
        %187 = sbr.rel (%p184) target = $region12
      $region11: #{tpu_custom_call.1} parent=5 // pred_region
        %s188 = ssub.s32 %s17, 1
        // Predicated region
        $region13: #{tpu_custom_call.1} parent=11 // pred_check
          %p189 = pneg %p92
        $region14: #{tpu_custom_call.1} parent=11 // pred_check_branch
          %191 = sbr.rel (%p189) target = $region16
        $region15: #{tpu_custom_call.1} parent=11 // pred_region
          %193 = vsyncadd [#allocation6], 0
          %s194 = smul.addr %s28, 16
          %s195 = smul.addr %s194, 8
          %s196 = scalar_lea.hbm %s1, %s195
          %s197 = sshll.u32 %s196, 4
          %s198 = int_to_ptr.hbm [resolvable:$true] %s197
          %s199 = sshll.u32 [#allocation5], 4
          %s200 = int_to_ptr.vmem [resolvable:$true] %s199
          %205 = dma.hbm_to_vmem [thread:$0]  %s198, 2048, %s200, [#allocation6], 128, 128, 8
        $region16: #{tpu_custom_call.1} parent=11 // pred_fallthru
          _
        // Predicated region
        $region17: #{tpu_custom_call.1} parent=11 // pred_check
          %p206 = pneg %p118
        $region18: #{tpu_custom_call.1} parent=11 // pred_check_branch
          %208 = sbr.rel (%p206) target = $region20
        $region19: #{tpu_custom_call.1} parent=11 // pred_region
          %p209 = scmp.lt.s32.totalorder %s28, 0
          %s210 = scalar_select %p209, %s28, 0
          %s211 = scalar_lea.vmem %s2, %s210
        $region20: #{tpu_custom_call.1} parent=11 // pred_fallthru
          _
        // Predicated region
        $region21: #{tpu_custom_call.1} parent=11 // pred_check
          %p212 = pneg %p144
        $region22: #{tpu_custom_call.1} parent=11 // pred_check_branch
          %214 = sbr.rel (%p212) target = $region24
        $region23: #{tpu_custom_call.1} parent=11 // pred_region
          %p215 = scmp.lt.s32.totalorder %s28, 0
          %s216 = scalar_select %p215, %s28, 0
          %s217 = scalar_lea.vmem %s3, %s216
        $region24: #{tpu_custom_call.1} parent=11 // pred_fallthru
          _
      $region12: #{tpu_custom_call.1} parent=5 // pred_fallthru
        _
      %p218 = scmp.lt.s32.totalorder %s17, 2
      // Predicated region
      $region25: #{tpu_custom_call.1} parent=5 // pred_check
        %p219 = pneg %p218
      $region26: #{tpu_custom_call.1} parent=5 // pred_check_branch
        %221 = sbr.rel (%p219) target = $region28
      $region27: #{tpu_custom_call.1} parent=5 // pred_region
        // Predicated region
        $region29: #{tpu_custom_call.1} parent=27 // pred_check
          %p222 = pneg %p60
        $region30: #{tpu_custom_call.1} parent=27 // pred_check_branch
          %224 = sbr.rel (%p222) target = $region32
        $region31: #{tpu_custom_call.1} parent=27 // pred_region
          %s225 = sand.u32 %s50, 1
          %s226 = scalar_lea.sflag [#allocation3], %s225
          %s227 = sand.u32 %s50, 1
          %s228 = smul.addr %s227, 16
          %s229 = scalar_lea.vmem [#allocation2], %s228
          %231 = vsyncadd %s226, 0
          %s232 = smul.addr %s26, 2
          %s233 = smul.addr %s25, 2
          %s234 = sadd.s32 %s232, %s233
          %s235 = smul.addr %s24, 2
          %s236 = sadd.s32 %s234, %s235
          %s237 = smul.addr %s236, 8
          %s238 = scalar_lea.hbm %s0, %s237
          %s239 = sshll.u32 %s238, 4
          %s240 = int_to_ptr.hbm [resolvable:$true] %s239
          %s241 = sshll.u32 %s229, 4
          %s242 = int_to_ptr.vmem [resolvable:$true] %s241
          %247 = dma.hbm_to_vmem [thread:$0]  %s240, 256, %s242, %s226, 128, 128, 8
        $region32: #{tpu_custom_call.1} parent=27 // pred_fallthru
          _
      $region28: #{tpu_custom_call.1} parent=5 // pred_fallthru
        _
      %p248 = scmp.le.s32.totalorder 1, %s17
      %p249 = scmp.lt.s32.totalorder %s17, 3
      %p250 = pnand %p248, %p249
      %p251 = pneg %p250
      // Predicated region
      $region33: #{tpu_custom_call.1} parent=5 // pred_check
        _
      $region34: #{tpu_custom_call.1} parent=5 // pred_check_branch
        %253 = sbr.rel (%p250) target = $region36
      $region35: #{tpu_custom_call.1} parent=5 // pred_region
        %s254 = ssub.s32 %s17, 1
        %s255 = sand.u32 %s53, 1
        %s256 = scalar_lea.sflag [#allocation3], %s255
        %s257 = sand.u32 %s53, 1
        %s258 = smul.addr %s257, 16
        %s259 = scalar_lea.vmem [#allocation2], %s258
        // Predicated region
        $region37: #{tpu_custom_call.1} parent=35 // pred_check
          %p260 = pneg %p66
        $region38: #{tpu_custom_call.1} parent=35 // pred_check_branch
          %262 = sbr.rel (%p260) target = $region40
        $region39: #{tpu_custom_call.1} parent=35 // pred_region
          %264 = dma.done %s256, 256
        $region40: #{tpu_custom_call.1} parent=35 // pred_fallthru
          _
        // Predicated region
        $region41: #{tpu_custom_call.1} parent=35 // pred_check
          %p265 = pneg %p92
        $region42: #{tpu_custom_call.1} parent=35 // pred_check_branch
          %267 = sbr.rel (%p265) target = $region44
        $region43: #{tpu_custom_call.1} parent=35 // pred_region
          %269 = dma.done [#allocation6], 2048
        $region44: #{tpu_custom_call.1} parent=35 // pred_fallthru
          _
        %s270 = sand.u32 %s53, 1
        %s271 = scalar_lea.sflag [#allocation3], %s270
        %s272 = sand.u32 %s53, 1
        %s273 = smul.addr %s272, 16
        %s274 = scalar_lea.vmem [#allocation2], %s273
        %p275 = pneg %p66
        %p276 = pneg %p63
        %p277 = pneg %p92
        %p278 = pneg %p89
        %p279 = scmp.lt.s32.totalorder %s28, 0
        %s280 = scalar_select %p279, %s28, 0
        %s281 = scalar_lea.vmem %s2, %s280
        %p282 = pneg %p118
        %p283 = pneg %p115
        %p284 = scmp.lt.s32.totalorder %s28, 0
        %s285 = scalar_select %p284, %s28, 0
        %s286 = scalar_lea.vmem %s3, %s285
        %p287 = pneg %p144
        %p288 = pneg %p141
        %p289 = pneg %p174
        %p290 = pneg %p171
        %s291 = sand.u32 %s161, 1
        %s292 = scalar_lea.sflag [#allocation4], %s291
        %s293 = sand.u32 %s161, 1
        %s294 = smul.addr %s293, 16
        %s295 = scalar_lea.vmem [#allocation7], %s294
        %p296 = scmp.lt.s32.totalorder %s28, 0
        %s297 = scalar_select %p296, %s28, 0
        %s298 = scalar_lea.vmem %s2, %s297
        %p299 = scmp.lt.s32.totalorder %s28, 0
        %s300 = scalar_select %p299, %s28, 0
        %s301 = scalar_lea.vmem %s3, %s300
        %s302 = smul.u32 2, %s29
        %v303 = vld [vmem:[%s259] sm:$0xff]
        %v304 = vld [vmem:[%s259 + $0x8] sm:$0xff]
        %v305 = vld [vmem:[#allocation5] sm:$0xff]
        %v306 = vld [vmem:[#allocation5 + $0x8] sm:$0xff]
        %v307 = vld [vmem:[#allocation5 + $0x10] sm:$0xff]
        %v308 = vld [vmem:[#allocation5 + $0x18] sm:$0xff]
        %v309 = vld [vmem:[#allocation5 + $0x20] sm:$0xff]
        %v310 = vld [vmem:[#allocation5 + $0x28] sm:$0xff]
        %v311 = vld [vmem:[#allocation5 + $0x30] sm:$0xff]
        %v312 = vld [vmem:[#allocation5 + $0x38] sm:$0xff]
        %v313 = vld [vmem:[#allocation5 + $0x40] sm:$0xff]
        %v314 = vld [vmem:[#allocation5 + $0x48] sm:$0xff]
        %v315 = vld [vmem:[#allocation5 + $0x50] sm:$0xff]
        %v316 = vld [vmem:[#allocation5 + $0x58] sm:$0xff]
        %v317 = vld [vmem:[#allocation5 + $0x60] sm:$0xff]
        %v318 = vld [vmem:[#allocation5 + $0x68] sm:$0xff]
        %v319 = vld [vmem:[#allocation5 + $0x70] sm:$0xff]
        %v320 = vld [vmem:[#allocation5 + $0x78] sm:$0xff]
        %321 = vmatpush.msra.mxu0 %v320
        %322 = vmatpush.msra.mxu0 %v319
        %323 = vmatpush.msra.mxu0 %v318
        %324 = vmatpush.msra.mxu0 %v317
        %325 = vmatpush.msra.mxu0 %v316
        %326 = vmatpush.msra.mxu0 %v315
        %327 = vmatpush.msra.mxu0 %v314
        %328 = vmatpush.msra.mxu0 %v313
        %329 = vmatpush.msra.mxu0 %v312
        %330 = vmatpush.msra.mxu0 %v311
        %331 = vmatpush.msra.mxu0 %v310
        %332 = vmatpush.msra.mxu0 %v309
        %333 = vmatpush.msra.mxu0 %v308
        %334 = vmatpush.msra.mxu0 %v307
        %335 = vmatpush.msra.mxu0 %v306
        %336 = vmatpush.msra.mxu0 %v305
        %337 = vmatmul.f32.gmra.mxu0 %v303
        %v338 = vpop.f32.mrf.mxu0
        %v339 = vadd.f32 0.0, %v338
        %340 = vmatmul.f32.gmra.mxu0 %v304
        %v341 = vpop.f32.mrf.mxu0
        %v342 = vadd.f32 0.0, %v341
        %343 = vdwg.mxu0
        %v344 = vld [vmem:[%s298] sm:$0x1]
        %v346 = vperm.slane %v344, 0
        %v348 = vmul.f32 %v339, %v346
        %v349 = vmul.f32 %v342, %v346
        %v350 = vld [vmem:[%s301] sm:$0x1]
        %v352 = vperm.slane %v350, 0
        %v354 = vadd.f32 %v348, %v352
        %v355 = vadd.f32 %v349, %v352
        %v356 = vmax.f32 %v354, 0.0
        %v357 = vmax.f32 %v355, 0.0
        %358 = vst [vmem:[%s295] sm:$0xff] %v356
        %359 = vst [vmem:[%s295 + $0x8] sm:$0xff] %v357
        %s360 = sand.u32 %s161, 1
        %s361 = scalar_lea.sflag [#allocation4], %s360
        %s362 = sand.u32 %s161, 1
        %s363 = smul.addr %s362, 16
        %s364 = scalar_lea.vmem [#allocation7], %s363
        // Predicated region
        $region45: #{tpu_custom_call.1} parent=35 // pred_check
          %p365 = pneg %p171
        $region46: #{tpu_custom_call.1} parent=35 // pred_check_branch
          %367 = sbr.rel (%p365) target = $region48
        $region47: #{tpu_custom_call.1} parent=35 // pred_region
          %s368 = smul.u32 2, %s29
          %370 = vsyncadd %s361, 0
          %s371 = smul.addr %s28, 2
          %s372 = sadd.s32 %s368, %s371
          %s373 = smul.addr %s27, 2
          %s374 = sadd.s32 %s372, %s373
          %s375 = smul.addr %s374, 8
          %s376 = scalar_lea.hbm %s4, %s375
          %s377 = sshll.u32 %s364, 4
          %s378 = int_to_ptr.vmem [resolvable:$true] %s377
          %s379 = sshll.u32 %s376, 4
          %s380 = int_to_ptr.hbm [resolvable:$true] %s379
          %385 = dma.vmem_to_hbm [thread:$0]  %s378, 256, %s380, %s361, 128, 128, 8
        $region48: #{tpu_custom_call.1} parent=35 // pred_fallthru
          _
      $region36: #{tpu_custom_call.1} parent=5 // pred_fallthru
        _
      %p386 = scmp.le.s32.totalorder 2, %s17
      // Predicated region
      $region49: #{tpu_custom_call.1} parent=5 // pred_check
        %p387 = pneg %p386
      $region50: #{tpu_custom_call.1} parent=5 // pred_check_branch
        %389 = sbr.rel (%p387) target = $region52
      $region51: #{tpu_custom_call.1} parent=5 // pred_region
        %s390 = ssub.s32 %s17, 2
        // Predicated region
        $region53: #{tpu_custom_call.1} parent=51 // pred_check
          %p391 = pneg %p177
        $region54: #{tpu_custom_call.1} parent=51 // pred_check_branch
          %393 = sbr.rel (%p391) target = $region56
        $region55: #{tpu_custom_call.1} parent=51 // pred_region
          %s394 = sand.u32 %s162, 1
          %s395 = scalar_lea.sflag [#allocation4], %s394
          %s396 = sand.u32 %s162, 1
          %s397 = smul.addr %s396, 16
          %s398 = scalar_lea.vmem [#allocation7], %s397
          %400 = dma.done %s395, 256
        $region56: #{tpu_custom_call.1} parent=51 // pred_fallthru
          _
      $region52: #{tpu_custom_call.1} parent=5 // pred_fallthru
        _
    $region6: #{tpu_custom_call.1} parent=1 // loop_footer
      %s21 = sadd.s32 1, %s17
    $region7: #{tpu_custom_call.1} parent=1 // loop_footer_branch
      %16 = sbr.rel target = $region3
    $region8: #{tpu_custom_call.1} parent=1 // loop_exit
      _
    %401 = vsyncpa [#allocation3], 1
    %s402 = scalar_lea.sflag [#allocation3], 1
    %403 = vsyncpa %s402, 1
    %404 = vsyncpa [#allocation6], 1
    %405 = vsyncpa [#allocation4], 1
    %s406 = scalar_lea.sflag [#allocation4], 1
    %407 = vsyncpa %s406, 1

</llo_original>
